<compile_context>
chip_gen: v5e
topology: v5e:2x2
jax: 0.10.0
libtpu: 0.0.40
codegen_flags: <defaults>
</compile_context>

<pallas_src>
import jax
import jax.numpy as jnp
import numpy as np
from jax.experimental import pallas as pl
from jax.experimental.pallas import tpu as pltpu

P = 128      # minimum lane width (one vreg lane width)
SUB = 8      # sublane multiple for the batch dim
H1 = 10      # fc1 out features (PyTorch module)
H2 = 20      # fc2 out features (PyTorch module)


def _round_up(n, m):
    return (n + m - 1) // m * m


# ------------------------------ kernel body -----------------------------------

def packed_mlp_kernel(x_ref, w_ref, o_ref):
    """All K heads in one shot.

    x_ref: (Bp, Wp) f32, lane `input_size` holds the constant 1.0 (bias lane).
    w_ref: (3, Wp, Wp) f32, block-packed weights with biases folded in.
    o_ref: (Bp, Wp) f32, head k's outputs in lanes [k*out, (k+1)*out).
    """
    h = jnp.dot(x_ref[...], w_ref[0], preferred_element_type=jnp.float32)
    h = jnp.maximum(h, 0.0)                                   # ReLU (keeps the 1-lane)
    h = jnp.dot(h, w_ref[1], preferred_element_type=jnp.float32)
    h = jnp.maximum(h, 0.0)
    o_ref[...] = jnp.dot(h, w_ref[2], preferred_element_type=jnp.float32)


# ------------------------------ parameters ------------------------------------

def init_bootstrapped_params(key, k_heads, input_size, output_size):
    """Deterministic parameter init (PyTorch-Linear-style uniform bounds)."""
    params = {}
    dims = [(input_size, H1), (H1, H2), (H2, output_size)]
    keys = jax.random.split(key, k_heads * len(dims) * 2)
    ki = 0
    for li, (fan_in, fan_out) in enumerate(dims, start=1):
        bound = 1.0 / np.sqrt(fan_in)
        ws, bs = [], []
        for _ in range(k_heads):
            w = jax.random.uniform(keys[ki], (fan_in, fan_out), jnp.float32, -bound, bound)
            b = jax.random.uniform(keys[ki + 1], (1, fan_out), jnp.float32, -bound, bound)
            ki += 2
            ws.append(w)
            bs.append(b)
        params[f"w{li}"] = jnp.stack(ws)   # (K, fan_in, fan_out)
        params[f"b{li}"] = jnp.stack(bs)   # (K, 1, fan_out)
    return params


def pack_bootstrapped_params(params):
    """Build the block-packed, bias-folded weight tensor ONCE.

    Layout (per layer l, packed lane width Wp):
      layer 1: rows 0..in-1   = fc1_k weights, columns [k*H1, (k+1)*H1)
               row  in        = fc1_k bias    (driven by the constant-1 input lane)
               W[in, K*H1]    = 1.0           (propagate the constant-1 lane)
      layer 2: block-diagonal fc2_k in rows [k*H1,..) / cols [k*H2,..);
               row K*H1 = fc2_k bias; W[K*H1, K*H2] = 1.0
      layer 3: block-diagonal fc3_k; row K*H2 = fc3_k bias
    Zero padding elsewhere is math-preserving (ReLU(0)=0; padded lanes sliced off).
    """
    w1 = np.asarray(params["w1"]); b1 = np.asarray(params["b1"])
    w2 = np.asarray(params["w2"]); b2 = np.asarray(params["b2"])
    w3 = np.asarray(params["w3"]); b3 = np.asarray(params["b3"])
    K, in_size, _ = w1.shape
    out_size = w3.shape[2]

    need = max(in_size + 1, K * H1 + 1, K * H2 + 1, K * out_size)
    Wp = _round_up(need, P)

    W = np.zeros((3, Wp, Wp), np.float32)
    c0 = in_size       # constant-1 lane index in the input
    c1 = K * H1        # constant-1 lane index in the layer-1 output
    c2 = K * H2        # constant-1 lane index in the layer-2 output
    for k in range(K):
        W[0, :in_size, k * H1:(k + 1) * H1] = w1[k]
        W[0, c0,       k * H1:(k + 1) * H1] = b1[k, 0]
        W[1, k * H1:(k + 1) * H1, k * H2:(k + 1) * H2] = w2[k]
        W[1, c1,                  k * H2:(k + 1) * H2] = b2[k, 0]
        W[2, k * H2:(k + 1) * H2, k * out_size:(k + 1) * out_size] = w3[k]
        W[2, c2,                  k * out_size:(k + 1) * out_size] = b3[k, 0]
    W[0, c0, c1] = 1.0   # carry the constant-1 lane input -> layer-1 output
    W[1, c1, c2] = 1.0   # carry the constant-1 lane layer-1 -> layer-2 output

    meta = {"k": K, "input_size": in_size, "output_size": out_size, "width": Wp}
    return jnp.asarray(W), meta


# ------------------------------ forward passes ---------------------------------

@jax.jit
def _forward_packed(x, w_packed):
    """Run all heads: one grid step, 3 matmuls total."""
    B, D = x.shape
    Wp = w_packed.shape[-1]
    bp = _round_up(max(B, SUB), SUB)
    ones = jnp.ones((B, 1), jnp.float32)                  # constant-1 bias lane
    x_aug = jnp.concatenate([x.astype(jnp.float32), ones], axis=1)
    x_aug = jnp.pad(x_aug, ((0, bp - B), (0, Wp - D - 1)))

    grid_spec = pltpu.PrefetchScalarGridSpec(
        num_scalar_prefetch=0,
        grid=(1,),
        in_specs=[
            pl.BlockSpec((bp, Wp), lambda i: (0, 0)),       # x (augmented)
            pl.BlockSpec((3, Wp, Wp), lambda i: (0, 0, 0)), # all 3 packed layers
        ],
        out_specs=pl.BlockSpec((bp, Wp), lambda i: (0, 0)),
    )
    return pl.pallas_call(
        packed_mlp_kernel,
        out_shape=jax.ShapeDtypeStruct((bp, Wp), jnp.float32),
        grid_spec=grid_spec,
        compiler_params=pltpu.CompilerParams(dimension_semantics=("arbitrary",)),
    )(x_aug, w_packed)


def _as_batch(x):
    x = jnp.asarray(x, jnp.float32)
    if x.ndim == 1:
        return x[None, :], True
    return x, False


def bootstrapped_heads(x, packed):
    """Equivalent of Bootstrapped_network._heads(x): all K head outputs, (K, B, out)."""
    w_packed, meta = packed
    K, out_size = meta["k"], meta["output_size"]
    x, squeezed = _as_batch(x)
    B = x.shape[0]
    out_pad = _forward_packed(x, w_packed)
    out = out_pad[:B, :K * out_size].reshape(B, K, out_size).transpose(1, 0, 2)
    return out[:, 0, :] if squeezed else out


def bootstrapped_forward(x, k, packed):
    """Equivalent of Bootstrapped_network.forward(x, k)."""
    w_packed, meta = packed
    K, out_size = meta["k"], meta["output_size"]
    if not 0 <= int(k) < K:                       # match PyTorch ModuleList indexing
        raise IndexError(f"head index {k} out of range for {K} heads")
    x, squeezed = _as_batch(x)
    B = x.shape[0]
    out_pad = _forward_packed(x, w_packed)
    out = out_pad[:B, int(k) * out_size:(int(k) + 1) * out_size]
    return out[0] if squeezed else out


def bootstrapped_forward_batched(x, ks, packed):
    """Many (x_i, k_i) queries in ONE pallas_call (typical RL acting loop)."""
    w_packed, meta = packed
    K, out_size = meta["k"], meta["output_size"]
    x, _ = _as_batch(x)
    B = x.shape[0]
    out_pad = _forward_packed(x, w_packed)
    out_all = out_pad[:B, :K * out_size].reshape(B, K, out_size)
    ks = jnp.asarray(ks, jnp.int32)
    return jnp.take_along_axis(out_all, ks[:, None, None], axis=1)[:, 0, :]


def bootstrapped_forward_ref(x, k, params):
    """Pure-JAX f32 reference (identical math) for the correctness check."""
    h = jnp.maximum(x @ params["w1"][k] + params["b1"][k], 0.0)
    h = jnp.maximum(h @ params["w2"][k] + params["b2"][k], 0.0)
    return h @ params["w3"][k] + params["b3"][k]


# ------------------------------ demo / test ------------------------------------

if __name__ == "__main__":
    K_HEADS = 5
    INPUT_SIZE = 8     # e.g. one-hot state of an 8-state chain MDP
    OUTPUT_SIZE = 2    # e.g. 2 actions
    BATCH = 4
    HEAD = 3

    key = jax.random.PRNGKey(0)
    pkey, xkey = jax.random.split(key)

    params = init_bootstrapped_params(pkey, K_HEADS, INPUT_SIZE, OUTPUT_SIZE)
    packed = pack_bootstrapped_params(params)      # padding/packing done ONCE here
    x = jax.random.normal(xkey, (BATCH, INPUT_SIZE), dtype=jnp.float32)

    # forward(x, k): single selected head.
    out = jax.block_until_ready(bootstrapped_forward(x, HEAD, packed))
    ref = bootstrapped_forward_ref(x, HEAD, params)
    np.testing.assert_allclose(np.asarray(out), np.asarray(ref), rtol=1e-2, atol=1e-2)

    # _heads(x): all K heads from ONE grid step / 3 matmuls.
    all_out = jax.block_until_ready(bootstrapped_heads(x, packed))
    for kk in range(K_HEADS):
        ref_k = bootstrapped_forward_ref(x, kk, params)
        np.testing.assert_allclose(np.asarray(all_out[kk]), np.asarray(ref_k),
                                   rtol=1e-2, atol=1e-2)

    # Batched (x_i, k_i) queries in one call.
    ks = np.array([0, 1, 2, 4], dtype=np.int32)
    bat = jax.block_until_ready(bootstrapped_forward_batched(x, ks, packed))
    for i, kk in enumerate(ks):
        ref_i = bootstrapped_forward_ref(x[i:i + 1], int(kk), params)
        np.testing.assert_allclose(np.asarray(bat[i:i + 1]), np.asarray(ref_i),
                                   rtol=1e-2, atol=1e-2)

    print("KERNEL_OK")
</pallas_src>

<mosaic_0001>
module attributes {stable_mosaic.version = 11 : i64} {
  func.func @packed_mlp_kernel(%arg0: i32, %arg1: memref<8x128xf32, #tpu.memory_space<vmem>>, %arg2: memref<3x128x128xf32, #tpu.memory_space<vmem>>, %arg3: memref<8x128xf32, #tpu.memory_space<vmem>>) attributes {dimension_semantics = [#tpu.dimension_semantics<arbitrary>], iteration_bounds = array<i64: 1>, scalar_prefetch = 0 : i64, scratch_operands = 0 : i64, tpu.core_type = #tpu.core_type<tc>, window_params = [{pipeline_mode = #tpu.pipeline_mode<synchronous>, transform_indices = @transform_0, window_bounds = array<i64: 8, 128>}, {pipeline_mode = #tpu.pipeline_mode<synchronous>, transform_indices = @transform_1, window_bounds = array<i64: 3, 128, 128>}, {pipeline_mode = #tpu.pipeline_mode<synchronous>, transform_indices = @transform_2, window_bounds = array<i64: 8, 128>}]} {
    %c0 = arith.constant 0 : index
    %c0_0 = arith.constant 0 : index
    %0 = vector.load %arg1[%c0, %c0_0] : memref<8x128xf32, #tpu.memory_space<vmem>>, vector<8x128xf32>
    %c0_1 = arith.constant 0 : index
    %c0_2 = arith.constant 0 : index
    %c0_3 = arith.constant 0 : index
    %1 = vector.load %arg2[%c0_1, %c0_2, %c0_3] : memref<3x128x128xf32, #tpu.memory_space<vmem>>, vector<1x128x128xf32>
    %2 = vector.shape_cast %1 : vector<1x128x128xf32> to vector<128x128xf32>
    %cst = arith.constant dense<0.000000e+00> : vector<8x128xf32>
    %3 = tpu.matmul %0, %2, %cst {dimension_numbers = #tpu.dot_dimension_numbers<[1], [0], [0], [1], [0, 0, 1, 1], [], []>} : vector<8x128xf32>, vector<128x128xf32>, vector<8x128xf32> -> vector<8x128xf32>
    %cst_4 = arith.constant 0.000000e+00 : f32
    %4 = vector.broadcast %cst_4 : f32 to vector<8x128xf32>
    %5 = arith.maximumf %3, %4 : vector<8x128xf32>
    %c1 = arith.constant 1 : index
    %c0_5 = arith.constant 0 : index
    %c0_6 = arith.constant 0 : index
    %6 = vector.load %arg2[%c1, %c0_5, %c0_6] : memref<3x128x128xf32, #tpu.memory_space<vmem>>, vector<1x128x128xf32>
    %7 = vector.shape_cast %6 : vector<1x128x128xf32> to vector<128x128xf32>
    %cst_7 = arith.constant dense<0.000000e+00> : vector<8x128xf32>
    %8 = tpu.matmul %5, %7, %cst_7 {dimension_numbers = #tpu.dot_dimension_numbers<[1], [0], [0], [1], [0, 0, 1, 1], [], []>} : vector<8x128xf32>, vector<128x128xf32>, vector<8x128xf32> -> vector<8x128xf32>
    %cst_8 = arith.constant 0.000000e+00 : f32
    %9 = vector.broadcast %cst_8 : f32 to vector<8x128xf32>
    %10 = arith.maximumf %8, %9 : vector<8x128xf32>
    %c2 = arith.constant 2 : index
    %c0_9 = arith.constant 0 : index
    %c0_10 = arith.constant 0 : index
    %11 = vector.load %arg2[%c2, %c0_9, %c0_10] : memref<3x128x128xf32, #tpu.memory_space<vmem>>, vector<1x128x128xf32>
    %12 = vector.shape_cast %11 : vector<1x128x128xf32> to vector<128x128xf32>
    %cst_11 = arith.constant dense<0.000000e+00> : vector<8x128xf32>
    %13 = tpu.matmul %10, %12, %cst_11 {dimension_numbers = #tpu.dot_dimension_numbers<[1], [0], [0], [1], [0, 0, 1, 1], [], []>} : vector<8x128xf32>, vector<128x128xf32>, vector<8x128xf32> -> vector<8x128xf32>
    %c0_12 = arith.constant 0 : index
    %c0_13 = arith.constant 0 : index
    %14 = vector.load %arg3[%c0_12, %c0_13] : memref<8x128xf32, #tpu.memory_space<vmem>>, vector<8x128xf32>
    tpu.vector_store %arg3[%c0_12, %c0_13], %13 {strides = array<i32>} : memref<8x128xf32, #tpu.memory_space<vmem>>, vector<8x128xf32>,
    return
  }
  func.func @transform_0(%arg0: i32) -> (i32, i32) {
    %c0_i32 = arith.constant 0 : i32
    %c0_i32_0 = arith.constant 0 : i32
    %c0_i32_1 = arith.constant 0 : i32
    return %c0_i32, %c0_i32_0 : i32, i32
  }
  func.func @transform_1(%arg0: i32) -> (i32, i32, i32) {
    %c0_i32 = arith.constant 0 : i32
    %c0_i32_0 = arith.constant 0 : i32
    %c0_i32_1 = arith.constant 0 : i32
    %c0_i32_2 = arith.constant 0 : i32
    return %c0_i32, %c0_i32_0, %c0_i32_1 : i32, i32, i32
  }
  func.func @transform_2(%arg0: i32) -> (i32, i32) {
    %c0_i32 = arith.constant 0 : i32
    %c0_i32_0 = arith.constant 0 : i32
    %c0_i32_1 = arith.constant 0 : i32
    return %c0_i32, %c0_i32_0 : i32, i32
  }
}

</mosaic_0001>

<llo_original>
// kernel: _forward_packed.1
$region0: #{_forward_packed.1}
  #allocation0 [shape = 'u32[]', space=smem, size = 0x4, offset = 0x4, fixed_abs, tag = 'smem constant byte address 0x4 - core index']
  #allocation1 [shape = 'u32[72,128]{1,0:T(1,128)}', space=vmem, size = 0x9000, scoped, tag = 'internal scratch']
  %s0 = inlined_call_operand.vmem [shape: f32[8,128], index: 0, kind: input, shape index: {}]
  %s1 = inlined_call_operand.hbm [shape: f32[3,128,128], index: 1, kind: input, shape index: {}]
  %s2 = inlined_call_operand.hbm [shape: f32[8,128], index: 2, kind: output, shape index: {}]
  %s3 = sld [smem:[#allocation0]]
  $region22: #{_forward_packed.1} parent=0
    _
  %s5 = ssub.s32 1, %s3
  %s6 = scalar_select 0, %s5, %s3
  $region1: #{_forward_packed.1} parent=0
    #allocation2 [shape = 'u8[196608]{0}', space=vmem, size = 0x30000, scoped, tag = 'input window, operand 1, single buffered']
    #allocation3 [shape = 's32[1]{0}', space=sflag, size = 0x4, scoped, tag = 'scoped memory for _forward_packed.1']
    #allocation4 [shape = 's32[1]{0}', space=sflag, size = 0x4, scoped, tag = 'scoped memory for _forward_packed.1']
    #allocation5 [shape = 'u8[4096]{0}', space=vmem, size = 0x1000, scoped, tag = 'output window, operand 0, single buffered']
    %7 = vsyncpa [#allocation3], 0
    %8 = vsyncpa [#allocation4], 0
    // Predicated region
    $region2: #{_forward_packed.1} parent=1 // pred_check
      _
    $region3: #{_forward_packed.1} parent=1 // pred_check_branch
      %10 = sbr.rel (0) target = $region5
    $region4: #{_forward_packed.1} parent=1 // pred_region
      _
    $region5: #{_forward_packed.1} parent=1 // pred_fallthru
      _
    // Predicated region
    $region6: #{_forward_packed.1} parent=1 // pred_check
      _
    $region7: #{_forward_packed.1} parent=1 // pred_check_branch
      %12 = sbr.rel (0) target = $region9
    $region8: #{_forward_packed.1} parent=1 // pred_region
      %14 = vsyncadd [#allocation3], 0
      %s15 = sshll.u32 %s1, 4
      %s16 = int_to_ptr.hbm [resolvable:$true] %s15
      %s17 = sshll.u32 [#allocation2], 4
      %s18 = int_to_ptr.vmem [resolvable:$true] %s17
      %23 = dma.hbm_to_vmem [thread:$0]  %s16, 6144, %s18, [#allocation3], 128, 128, 8
    $region9: #{_forward_packed.1} parent=1 // pred_fallthru
      _
    // Predicated region
    $region10: #{_forward_packed.1} parent=1 // pred_check
      _
    $region11: #{_forward_packed.1} parent=1 // pred_check_branch
      %25 = sbr.rel (0) target = $region13
    $region12: #{_forward_packed.1} parent=1 // pred_region
      %27 = dma.done [#allocation3], 6144
    $region13: #{_forward_packed.1} parent=1 // pred_fallthru
      _
    %v28 = vld [vmem:[%s0] sm:$0xff]
    %v29 = vld [vmem:[#allocation2] sm:$0xff]
    %v30 = vld [vmem:[#allocation2 + $0x8] sm:$0xff]
    %v31 = vld [vmem:[#allocation2 + $0x10] sm:$0xff]
    %v32 = vld [vmem:[#allocation2 + $0x18] sm:$0xff]
    %v33 = vld [vmem:[#allocation2 + $0x20] sm:$0xff]
    %v34 = vld [vmem:[#allocation2 + $0x28] sm:$0xff]
    %v35 = vld [vmem:[#allocation2 + $0x30] sm:$0xff]
    %v36 = vld [vmem:[#allocation2 + $0x38] sm:$0xff]
    %v37 = vld [vmem:[#allocation2 + $0x40] sm:$0xff]
    %v38 = vld [vmem:[#allocation2 + $0x48] sm:$0xff]
    %v39 = vld [vmem:[#allocation2 + $0x50] sm:$0xff]
    %v40 = vld [vmem:[#allocation2 + $0x58] sm:$0xff]
    %v41 = vld [vmem:[#allocation2 + $0x60] sm:$0xff]
    %v42 = vld [vmem:[#allocation2 + $0x68] sm:$0xff]
    %v43 = vld [vmem:[#allocation2 + $0x70] sm:$0xff]
    %v44 = vld [vmem:[#allocation2 + $0x78] sm:$0xff]
    %45 = vmatpush.msra.mxu0 %v44
    %46 = vmatpush.msra.mxu0 %v43
    %47 = vmatpush.msra.mxu0 %v42
    %48 = vmatpush.msra.mxu0 %v41
    %49 = vmatpush.msra.mxu0 %v40
    %50 = vmatpush.msra.mxu0 %v39
    %51 = vmatpush.msra.mxu0 %v38
    %52 = vmatpush.msra.mxu0 %v37
    %53 = vmatpush.msra.mxu0 %v36
    %54 = vmatpush.msra.mxu0 %v35
    %55 = vmatpush.msra.mxu0 %v34
    %56 = vmatpush.msra.mxu0 %v33
    %57 = vmatpush.msra.mxu0 %v32
    %58 = vmatpush.msra.mxu0 %v31
    %59 = vmatpush.msra.mxu0 %v30
    %60 = vmatpush.msra.mxu0 %v29
    %61 = vmatmul.f32.gmra.mxu0 %v28
    %v62 = vpop.f32.mrf.mxu0
    %v63 = vadd.f32 0.0, %v62
    %64 = vdwg.mxu0
    %v65 = vmax.f32 %v63, 0.0
    %s66 = scalar_lea.vmem [#allocation2], 128
    %v67 = vld [vmem:[%s66] sm:$0xff]
    %v68 = vld [vmem:[%s66 + $0x8] sm:$0xff]
    %v69 = vld [vmem:[%s66 + $0x10] sm:$0xff]
    %v70 = vld [vmem:[%s66 + $0x18] sm:$0xff]
    %v71 = vld [vmem:[%s66 + $0x20] sm:$0xff]
    %v72 = vld [vmem:[%s66 + $0x28] sm:$0xff]
    %v73 = vld [vmem:[%s66 + $0x30] sm:$0xff]
    %v74 = vld [vmem:[%s66 + $0x38] sm:$0xff]
    %v75 = vld [vmem:[%s66 + $0x40] sm:$0xff]
    %v76 = vld [vmem:[%s66 + $0x48] sm:$0xff]
    %v77 = vld [vmem:[%s66 + $0x50] sm:$0xff]
    %v78 = vld [vmem:[%s66 + $0x58] sm:$0xff]
    %v79 = vld [vmem:[%s66 + $0x60] sm:$0xff]
    %v80 = vld [vmem:[%s66 + $0x68] sm:$0xff]
    %v81 = vld [vmem:[%s66 + $0x70] sm:$0xff]
    %v82 = vld [vmem:[%s66 + $0x78] sm:$0xff]
    %83 = vmatpush.msra.mxu0 %v82
    %84 = vmatpush.msra.mxu0 %v81
    %85 = vmatpush.msra.mxu0 %v80
    %86 = vmatpush.msra.mxu0 %v79
    %87 = vmatpush.msra.mxu0 %v78
    %88 = vmatpush.msra.mxu0 %v77
    %89 = vmatpush.msra.mxu0 %v76
    %90 = vmatpush.msra.mxu0 %v75
    %91 = vmatpush.msra.mxu0 %v74
    %92 = vmatpush.msra.mxu0 %v73
    %93 = vmatpush.msra.mxu0 %v72
    %94 = vmatpush.msra.mxu0 %v71
    %95 = vmatpush.msra.mxu0 %v70
    %96 = vmatpush.msra.mxu0 %v69
    %97 = vmatpush.msra.mxu0 %v68
    %98 = vmatpush.msra.mxu0 %v67
    %99 = vmatmul.f32.gmra.mxu0 %v65
    %v100 = vpop.f32.mrf.mxu0
    %v101 = vadd.f32 0.0, %v100
    %102 = vdwg.mxu0
    %v103 = vmax.f32 %v101, 0.0
    %s104 = scalar_lea.vmem [#allocation2], 256
    %v105 = vld [vmem:[%s104] sm:$0xff]
    %v106 = vld [vmem:[%s104 + $0x8] sm:$0xff]
    %v107 = vld [vmem:[%s104 + $0x10] sm:$0xff]
    %v108 = vld [vmem:[%s104 + $0x18] sm:$0xff]
    %v109 = vld [vmem:[%s104 + $0x20] sm:$0xff]
    %v110 = vld [vmem:[%s104 + $0x28] sm:$0xff]
    %v111 = vld [vmem:[%s104 + $0x30] sm:$0xff]
    %v112 = vld [vmem:[%s104 + $0x38] sm:$0xff]
    %v113 = vld [vmem:[%s104 + $0x40] sm:$0xff]
    %v114 = vld [vmem:[%s104 + $0x48] sm:$0xff]
    %v115 = vld [vmem:[%s104 + $0x50] sm:$0xff]
    %v116 = vld [vmem:[%s104 + $0x58] sm:$0xff]
    %v117 = vld [vmem:[%s104 + $0x60] sm:$0xff]
    %v118 = vld [vmem:[%s104 + $0x68] sm:$0xff]
    %v119 = vld [vmem:[%s104 + $0x70] sm:$0xff]
    %v120 = vld [vmem:[%s104 + $0x78] sm:$0xff]
    %121 = vmatpush.msra.mxu0 %v120
    %122 = vmatpush.msra.mxu0 %v119
    %123 = vmatpush.msra.mxu0 %v118
    %124 = vmatpush.msra.mxu0 %v117
    %125 = vmatpush.msra.mxu0 %v116
    %126 = vmatpush.msra.mxu0 %v115
    %127 = vmatpush.msra.mxu0 %v114
    %128 = vmatpush.msra.mxu0 %v113
    %129 = vmatpush.msra.mxu0 %v112
    %130 = vmatpush.msra.mxu0 %v111
    %131 = vmatpush.msra.mxu0 %v110
    %132 = vmatpush.msra.mxu0 %v109
    %133 = vmatpush.msra.mxu0 %v108
    %134 = vmatpush.msra.mxu0 %v107
    %135 = vmatpush.msra.mxu0 %v106
    %136 = vmatpush.msra.mxu0 %v105
    %137 = vmatmul.f32.gmra.mxu0 %v103
    %v138 = vpop.f32.mrf.mxu0
    %v139 = vadd.f32 0.0, %v138
    %140 = vdwg.mxu0
    %141 = vst [vmem:[#allocation5] sm:$0xff] %v139
    // Predicated region
    $region14: #{_forward_packed.1} parent=1 // pred_check
      _
    $region15: #{_forward_packed.1} parent=1 // pred_check_branch
      %143 = sbr.rel (0) target = $region17
    $region16: #{_forward_packed.1} parent=1 // pred_region
      %145 = vsyncadd [#allocation4], 0
      %s147 = sshll.u32 [#allocation5], 4
      %s148 = int_to_ptr.vmem [resolvable:$true] %s147
      %s149 = sshll.u32 %s2, 4
      %s150 = int_to_ptr.hbm [resolvable:$true] %s149
      %152 = dma.vmem_to_hbm [thread:$0]  %s148, 128, %s150, [#allocation4]
    $region17: #{_forward_packed.1} parent=1 // pred_fallthru
      _
    // Predicated region
    $region18: #{_forward_packed.1} parent=1 // pred_check
      _
    $region19: #{_forward_packed.1} parent=1 // pred_check_branch
      %154 = sbr.rel (0) target = $region21
    $region20: #{_forward_packed.1} parent=1 // pred_region
      %156 = dma.done [#allocation4], 128
    $region21: #{_forward_packed.1} parent=1 // pred_fallthru
      _
    %157 = vsyncpa [#allocation3], 1
    %158 = vsyncpa [#allocation4], 1

</llo_original>
